<compile_context>
chip_gen: v5e
topology: v5e:2x2
jax: 0.10.0
libtpu: 0.0.40
codegen_flags: <defaults>
</compile_context>

<pallas_src>
from functools import partial

import numpy as np
import jax
import jax.numpy as jnp
from jax.experimental import pallas as pl
from jax.experimental.pallas import tpu as pltpu


def ddpm_schedules(beta1: float, beta2: float, T: int):
    """Pre-computed DDPM schedules (pure JAX glue, mirrors the torch version)."""
    assert beta1 < beta2 < 1.0, "beta1 and beta2 must be in ]0, 1["
    beta_t = (beta2 - beta1) * jnp.arange(0, T + 1, dtype=jnp.float32) / T + beta1
    sqrt_beta_t = jnp.sqrt(beta_t)
    alpha_t = 1.0 - beta_t
    log_alpha_t = jnp.log(alpha_t)
    alphabar_t = jnp.exp(jnp.cumsum(log_alpha_t))
    sqrtab = jnp.sqrt(alphabar_t)
    oneover_sqrta = 1.0 / jnp.sqrt(alpha_t)
    sqrtmab = jnp.sqrt(1.0 - alphabar_t)
    mab_over_sqrtmab_inv = (1.0 - alpha_t) / sqrtmab
    return {
        "alpha_t": alpha_t,
        "oneover_sqrta": oneover_sqrta,
        "sqrt_beta_t": sqrt_beta_t,
        "alphabar_t": alphabar_t,
        "sqrtab": sqrtab,
        "sqrtmab": sqrtmab,
        "mab_over_sqrtmab": mab_over_sqrtmab_inv,
    }


def _noise_adder_kernel(a_ref, b_ref, x_ref, z_ref, xt_ref):
    """Pure streaming FMA on one (TILE_R, TILE_C) tile.

    a_ref : (TILE_R, 1) f32 -- sqrtab[t] per row
    b_ref : (TILE_R, 1) f32 -- sqrtmab[t] per row
    x_ref : (TILE_R, TILE_C) f32
    z_ref : (TILE_R, TILE_C) f32 -- pre-drawn N(0,1) noise
    xt_ref: (TILE_R, TILE_C) f32 -- output
    """
    a = a_ref[...]  # (TILE_R, 1) broadcasts across lanes
    b = b_ref[...]
    xt_ref[...] = (a * x_ref[...] + b * z_ref[...]).astype(xt_ref.dtype)


def _pick_tile(dim: int, target: int, align: int) -> int:
    """Largest tile <= target that is a multiple of `align` and divides `dim`.

    Falls back to the full dimension (always legal per the (8,128) rule) when
    no aligned divisor exists.
    """
    if dim <= target:
        return dim
    if dim % align != 0:
        return dim
    start = (min(target, dim) // align) * align
    for t in range(start, align - 1, -align):
        if dim % t == 0:
            return t
    return dim


@jax.jit
def _noise_adder_forward(sqrtab, sqrtmab, x, t, key):
    """Jitted forward: gathers the schedule, draws z, runs the Pallas kernel."""
    B, C, H, W = x.shape
    N = C * H * W

    t_flat = t.reshape(B)
    a = sqrtab[t_flat].astype(jnp.float32)   # (B,)
    b = sqrtmab[t_flat].astype(jnp.float32)  # (B,)

    # torch.randn_like(x)
    z = jax.random.normal(key, (B, C, H, W), dtype=jnp.float32)

    # Sublane-dense view: split each batch row into 8 sublane rows so small B
    # still fills the (8, 128) vreg tile.  Falls back to (B, N) if N % 8 != 0.
    SUB = 8
    if N % SUB == 0:
        rows, cols, rep = B * SUB, N // SUB, SUB
    else:
        rows, cols, rep = B, N, 1

    x2 = x.astype(jnp.float32).reshape(rows, cols)
    z2 = z.reshape(rows, cols)
    a2 = jnp.repeat(a, rep).reshape(rows, 1)
    b2 = jnp.repeat(b, rep).reshape(rows, 1)

    # Tile sizes: lane-dense (multiple of 128) up to 1024 lanes, up to 256
    # sublane rows.  Worst case per grid step (double-buffered x, z, xt):
    # 6 * 256 * 1024 * 4 B = 6 MiB, well inside v7x's 32 MiB scoped default.
    tile_r = _pick_tile(rows, 256, 8)
    tile_c = _pick_tile(cols, 1024, 128)
    grid = (rows // tile_r, cols // tile_c)

    xt2 = pl.pallas_call(
        _noise_adder_kernel,
        out_shape=jax.ShapeDtypeStruct((rows, cols), jnp.float32),
        grid=grid,
        in_specs=[
            pl.BlockSpec((tile_r, 1), lambda i, j: (i, 0)),       # a
            pl.BlockSpec((tile_r, 1), lambda i, j: (i, 0)),       # b
            pl.BlockSpec((tile_r, tile_c), lambda i, j: (i, j)),  # x
            pl.BlockSpec((tile_r, tile_c), lambda i, j: (i, j)),  # z
        ],
        out_specs=pl.BlockSpec((tile_r, tile_c), lambda i, j: (i, j)),
        compiler_params=pltpu.CompilerParams(
            dimension_semantics=("parallel", "parallel")),
        cost_estimate=pl.CostEstimate(
            flops=2 * rows * cols,
            transcendentals=0,
            bytes_accessed=3 * rows * cols * 4 + 2 * rows * 4),
    )(a2, b2, x2, z2)

    return xt2.reshape(B, C, H, W), z


class NoiseAdder:
    def __init__(self, n_time_steps: int, betas=(1e-4, 0.02)):
        self.n_time_steps = n_time_steps
        sched = ddpm_schedules(betas[0], betas[1], n_time_steps)
        self.sqrtab = sched["sqrtab"]    # (T+1,)
        self.sqrtmab = sched["sqrtmab"]  # (T+1,)

    def __call__(self, x, t, key):
        """
        x  : (B, C, H, W) float32
        t  : (B, 1) int32
        key: jax.random key (fresh per call, like torch's global RNG state)
        returns (x_t, z), both (B, C, H, W)
        """
        return _noise_adder_forward(self.sqrtab, self.sqrtmab, x, t, key)


if __name__ == "__main__":
    B, C, H, W = 2, 4, 16, 16
    T = 400

    key = jax.random.PRNGKey(0)
    kx, kt, kz = jax.random.split(key, 3)
    x = jax.random.normal(kx, (B, C, H, W), dtype=jnp.float32)
    t = jax.random.randint(kt, (B, 1), 1, T + 1, dtype=jnp.int32)

    noiser = NoiseAdder(T)
    x_t, z = noiser(x, t, kz)
    x_t = jax.block_until_ready(x_t)
    z = jax.block_until_ready(z)

    # Self-consistency check: x_t must equal sqrtab[t]*x + sqrtmab[t]*z
    # using the noise z that the forward pass itself produced.
    a = np.asarray(noiser.sqrtab)[np.asarray(t[:, 0])].reshape(B, 1, 1, 1)
    b = np.asarray(noiser.sqrtmab)[np.asarray(t[:, 0])].reshape(B, 1, 1, 1)
    ref = a * np.asarray(x) + b * np.asarray(z)
    np.testing.assert_allclose(np.asarray(x_t), ref, rtol=1e-5, atol=1e-5)
    assert x_t.shape == x.shape and z.shape == x.shape

    print("KERNEL_OK")
</pallas_src>

<mosaic_0001>
module attributes {stable_mosaic.version = 11 : i64} {
  func.func @_noise_adder_kernel(%arg0: i32, %arg1: i32, %arg2: memref<16x1xf32, #tpu.memory_space<vmem>>, %arg3: memref<16x1xf32, #tpu.memory_space<vmem>>, %arg4: memref<16x128xf32, #tpu.memory_space<vmem>>, %arg5: memref<16x128xf32, #tpu.memory_space<vmem>>, %arg6: memref<16x128xf32, #tpu.memory_space<vmem>>) attributes {dimension_semantics = [#tpu.dimension_semantics<parallel>, #tpu.dimension_semantics<parallel>], iteration_bounds = array<i64: 1, 1>, scalar_prefetch = 0 : i64, scratch_operands = 0 : i64, tpu.core_type = #tpu.core_type<tc>, window_params = [{transform_indices = @transform_0, window_bounds = array<i64: 16, 1>}, {transform_indices = @transform_1, window_bounds = array<i64: 16, 1>}, {transform_indices = @transform_2, window_bounds = array<i64: 16, 128>}, {transform_indices = @transform_3, window_bounds = array<i64: 16, 128>}, {transform_indices = @transform_4, window_bounds = array<i64: 16, 128>}]} {
    %c0 = arith.constant 0 : index
    %c0_0 = arith.constant 0 : index
    %0 = vector.load %arg2[%c0, %c0_0] : memref<16x1xf32, #tpu.memory_space<vmem>>, vector<16x1xf32>
    %c0_1 = arith.constant 0 : index
    %c0_2 = arith.constant 0 : index
    %1 = vector.load %arg3[%c0_1, %c0_2] : memref<16x1xf32, #tpu.memory_space<vmem>>, vector<16x1xf32>
    %c0_3 = arith.constant 0 : index
    %c0_4 = arith.constant 0 : index
    %2 = vector.load %arg4[%c0_3, %c0_4] : memref<16x128xf32, #tpu.memory_space<vmem>>, vector<16x128xf32>
    %3 = vector.broadcast %0 : vector<16x1xf32> to vector<16x128xf32>
    %4 = arith.mulf %3, %2 : vector<16x128xf32>
    %c0_5 = arith.constant 0 : index
    %c0_6 = arith.constant 0 : index
    %5 = vector.load %arg5[%c0_5, %c0_6] : memref<16x128xf32, #tpu.memory_space<vmem>>, vector<16x128xf32>
    %6 = vector.broadcast %1 : vector<16x1xf32> to vector<16x128xf32>
    %7 = arith.mulf %6, %5 : vector<16x128xf32>
    %8 = arith.addf %4, %7 : vector<16x128xf32>
    %c0_7 = arith.constant 0 : index
    %c0_8 = arith.constant 0 : index
    %9 = vector.load %arg6[%c0_7, %c0_8] : memref<16x128xf32, #tpu.memory_space<vmem>>, vector<16x128xf32>
    tpu.vector_store %arg6[%c0_7, %c0_8], %8 {strides = array<i32>} : memref<16x128xf32, #tpu.memory_space<vmem>>, vector<16x128xf32>,
    return
  }
  func.func @transform_0(%arg0: i32, %arg1: i32) -> (i32, i32) {
    %c0_i32 = arith.constant 0 : i32
    %c0_i32_0 = arith.constant 0 : i32
    return %arg0, %c0_i32 : i32, i32
  }
  func.func @transform_1(%arg0: i32, %arg1: i32) -> (i32, i32) {
    %c0_i32 = arith.constant 0 : i32
    %c0_i32_0 = arith.constant 0 : i32
    return %arg0, %c0_i32 : i32, i32
  }
  func.func @transform_2(%arg0: i32, %arg1: i32) -> (i32, i32) {
    %c0_i32 = arith.constant 0 : i32
    return %arg0, %arg1 : i32, i32
  }
  func.func @transform_3(%arg0: i32, %arg1: i32) -> (i32, i32) {
    %c0_i32 = arith.constant 0 : i32
    return %arg0, %arg1 : i32, i32
  }
  func.func @transform_4(%arg0: i32, %arg1: i32) -> (i32, i32) {
    %c0_i32 = arith.constant 0 : i32
    return %arg0, %arg1 : i32, i32
  }
}

</mosaic_0001>

<llo_original>
// kernel: _noise_adder_forward.1
$region0: #{_noise_adder_forward.1}
  #allocation0 [shape = 'u32[]', space=smem, size = 0x4, offset = 0x4, fixed_abs, tag = 'smem constant byte address 0x4 - core index']
  #allocation1 [shape = 'u32[72,128]{1,0:T(1,128)}', space=vmem, size = 0x9000, scoped, tag = 'internal scratch']
  %s0 = inlined_call_operand.vmem [shape: f32[16,1], index: 0, kind: input, shape index: {}]
  %s1 = inlined_call_operand.vmem [shape: f32[16,1], index: 1, kind: input, shape index: {}]
  %s2 = inlined_call_operand.vmem [shape: f32[16,128], index: 2, kind: input, shape index: {}]
  %s3 = inlined_call_operand.vmem [shape: f32[16,128], index: 3, kind: input, shape index: {}]
  %s4 = inlined_call_operand.vmem [shape: f32[16,128], index: 4, kind: output, shape index: {}]
  %s5 = sld [smem:[#allocation0]]
  $region26: #{_noise_adder_forward.1} parent=0
    _
  %s7 = ssub.s32 1, %s5
  %s8 = scalar_select 0, %s7, %s5
  // Predicated region
  $region2: #{_noise_adder_forward.1} parent=0 // pred_check
    _
  $region3: #{_noise_adder_forward.1} parent=0 // pred_check_branch
    %10 = sbr.rel (0) target = $region5
  $region4: #{_noise_adder_forward.1} parent=0 // pred_region
    _
  $region5: #{_noise_adder_forward.1} parent=0 // pred_fallthru
    _
  // Predicated region
  $region6: #{_noise_adder_forward.1} parent=0 // pred_check
    _
  $region7: #{_noise_adder_forward.1} parent=0 // pred_check_branch
    %12 = sbr.rel (0) target = $region9
  $region8: #{_noise_adder_forward.1} parent=0 // pred_region
    _
  $region9: #{_noise_adder_forward.1} parent=0 // pred_fallthru
    _
  // Predicated region
  $region10: #{_noise_adder_forward.1} parent=0 // pred_check
    _
  $region11: #{_noise_adder_forward.1} parent=0 // pred_check_branch
    %14 = sbr.rel (0) target = $region13
  $region12: #{_noise_adder_forward.1} parent=0 // pred_region
    _
  $region13: #{_noise_adder_forward.1} parent=0 // pred_fallthru
    _
  // Predicated region
  $region14: #{_noise_adder_forward.1} parent=0 // pred_check
    _
  $region15: #{_noise_adder_forward.1} parent=0 // pred_check_branch
    %16 = sbr.rel (0) target = $region17
  $region16: #{_noise_adder_forward.1} parent=0 // pred_region
    _
  $region17: #{_noise_adder_forward.1} parent=0 // pred_fallthru
    _
  %v17 = vld [vmem:[%s0] sm:$0xff]
  %v18 = vld [vmem:[%s0 + $0x8] sm:$0xff]
  %v19 = vld [vmem:[%s1] sm:$0xff]
  %v20 = vld [vmem:[%s1 + $0x8] sm:$0xff]
  %v21 = vld [vmem:[%s2] sm:$0xff]
  %v22 = vld [vmem:[%s2 + $0x8] sm:$0xff]
  %24 = vset.pattern.permute.xlu0 0
  %25 = vperm.xlu0 %24, %v17
  %v26 = vpop.permute.xlu0 %25
  %29 = vset.pattern.permute.xlu0 0
  %30 = vperm.xlu0 %29, %v18
  %v31 = vpop.permute.xlu0 %30
  %v33 = vmul.f32 %v26, %v21
  %v34 = vmul.f32 %v31, %v22
  %v35 = vld [vmem:[%s3] sm:$0xff]
  %v36 = vld [vmem:[%s3 + $0x8] sm:$0xff]
  %38 = vset.pattern.permute.xlu0 0
  %39 = vperm.xlu0 %38, %v19
  %v40 = vpop.permute.xlu0 %39
  %43 = vset.pattern.permute.xlu0 0
  %44 = vperm.xlu0 %43, %v20
  %v45 = vpop.permute.xlu0 %44
  %v47 = vmul.f32 %v40, %v35
  %v48 = vmul.f32 %v45, %v36
  %v49 = vadd.f32 %v33, %v47
  %v50 = vadd.f32 %v34, %v48
  %51 = vst [vmem:[%s4] sm:$0xff] %v49
  %52 = vst [vmem:[%s4 + $0x8] sm:$0xff] %v50
  // Predicated region
  $region18: #{_noise_adder_forward.1} parent=0 // pred_check
    _
  $region19: #{_noise_adder_forward.1} parent=0 // pred_check_branch
    %54 = sbr.rel (0) target = $region21
  $region20: #{_noise_adder_forward.1} parent=0 // pred_region
    _
  $region21: #{_noise_adder_forward.1} parent=0 // pred_fallthru
    _
  // Predicated region
  $region22: #{_noise_adder_forward.1} parent=0 // pred_check
    _
  $region23: #{_noise_adder_forward.1} parent=0 // pred_check_branch
    %56 = sbr.rel (0) target = $region25
  $region24: #{_noise_adder_forward.1} parent=0 // pred_region
    _
  $region25: #{_noise_adder_forward.1} parent=0 // pred_fallthru
    _

</llo_original>
